<compile_context>
chip_gen: v7x
topology: tpu7x:2x2x1
jax: 0.10.0
libtpu: 0.0.40
codegen_flags: <defaults>
</compile_context>

<pallas_src>
import jax
import jax.numpy as jnp
from jax.experimental import pallas as pl
from jax.experimental.pallas import tpu as pltpu

# Dimensions implied by the module (REP_DIMENSION / GENDER_DIMENSION globals).
REP_DIMENSION = 256
GENDER_DIMENSION = 128
N_RANKING = REP_DIMENSION - GENDER_DIMENSION   # 128
N_ATTRIBUTE = GENDER_DIMENSION                 # 128

OUT_LANES = 128                                # lane-dense output slab width
COL_RANK, COL_ATTR, COL_ADV = 0, 1, 2


def _heads_kernel(cls_ref, w_pr_ref, w_pc_ref, b1_ref, w2r_ref, w2a_ref, b2_ref, out_ref):
    # Only the CLS rows were DMA'd; cast to bf16 for the MXU.
    x = cls_ref[...].astype(jnp.bfloat16)                            # (bb, 256)
    xr = x[:, :N_RANKING]                                            # (bb, 128)  ranking half
    xa = x[:, N_RANKING:]                                            # (bb, 128)  attribute half

    # Layer 1: two clean 128x128 matmuls (no dead zero tiles), f32 accumulate + bias + ReLU.
    h_r = jnp.dot(xr, w_pr_ref[...], preferred_element_type=jnp.float32) + b1_ref[:, :N_RANKING]
    h_a = jnp.dot(xa, w_pc_ref[...], preferred_element_type=jnp.float32) + b1_ref[:, N_RANKING:]
    h_r = jnp.maximum(h_r, 0.0).astype(jnp.bfloat16)                 # ReLU; dropout = identity (eval)
    h_a = jnp.maximum(h_a, 0.0).astype(jnp.bfloat16)

    # Layer 2 into a lane-dense (bb, 128) slab:
    #   col 0 = ranking_logits, col 1 = attribute_logits,
    #   col 2 = adv_attribute output (softmax over size-1 axis == 1.0, folded into bias).
    out_ref[...] = (
        jnp.dot(h_r, w2r_ref[...], preferred_element_type=jnp.float32)
        + jnp.dot(h_a, w2a_ref[...], preferred_element_type=jnp.float32)
        + b2_ref[...]
    )


def fuse_params(p):
    """Pack the live Linear layers into bf16 MXU weights + f32 lane-dense biases.

    The pre_adv_attribute / adv_attribute weights are dead for the forward pass:
    F.softmax over a (B, 1) tensor is identically 1.0, so the whole adv branch folds
    to the constant 1.0 in b2[:, COL_ADV].
    """
    b1 = jnp.concatenate([p["b_preranker"], p["b_preclassifier"]], axis=-1).astype(jnp.float32)  # (1,256)

    w2r = jnp.zeros((N_RANKING, OUT_LANES), jnp.float32).at[:, COL_RANK].set(p["w_ranking"][:, 0])
    w2a = jnp.zeros((N_ATTRIBUTE, OUT_LANES), jnp.float32).at[:, COL_ATTR].set(p["w_gender"][:, 0])
    b2 = jnp.zeros((1, OUT_LANES), jnp.float32)
    b2 = b2.at[0, COL_RANK].set(p["b_ranking"][0, 0])
    b2 = b2.at[0, COL_ATTR].set(p["b_gender"][0, 0])
    b2 = b2.at[0, COL_ADV].set(1.0)

    return {
        "w_pr": p["w_preranker"].astype(jnp.bfloat16),       # (128, 128)
        "w_pc": p["w_preclassifier"].astype(jnp.bfloat16),   # (128, 128)
        "b1": b1,                                            # (1, 256) f32
        "w2r": w2r.astype(jnp.bfloat16),                     # (128, 128)
        "w2a": w2a.astype(jnp.bfloat16),                     # (128, 128)
        "b2": b2,                                            # (1, 128) f32
    }


def disentangled_forward(last_hidden_state, fused, *, block_b=512):
    """last_hidden_state: (B, S, REP_DIMENSION), any float dtype.  Returns dict of (B, 1) outputs.

    Intended to run under jax.jit so the CLS slice and the tiny output-slab views fuse
    with the pallas_call instead of being standalone XLA ops.
    """
    # Wrapper-side CLS slice: only (B, 256) is DMA'd into the kernel, never (B, S, 256).
    cls = last_hidden_state[:, 0, :]
    B = cls.shape[0]
    bb = min(block_b, B)                      # block_b==B for small batches, 512 for serving
    grid = (pl.cdiv(B, bb),)

    def w_spec(shape):
        # Constant index_map -> weights/biases DMA'd once, VMEM-resident across grid steps.
        return pl.BlockSpec(shape, lambda i: (0, 0))

    slab = pl.pallas_call(
        _heads_kernel,
        out_shape=jax.ShapeDtypeStruct((B, OUT_LANES), jnp.float32),
        grid_spec=pltpu.PrefetchScalarGridSpec(
            num_scalar_prefetch=0,
            grid=grid,
            in_specs=[
                pl.BlockSpec((bb, REP_DIMENSION), lambda i: (i, 0)),   # CLS rows, blocked on batch
                w_spec((N_RANKING, N_RANKING)),                        # w_pr
                w_spec((N_ATTRIBUTE, N_ATTRIBUTE)),                    # w_pc
                w_spec((1, REP_DIMENSION)),                            # b1
                w_spec((N_RANKING, OUT_LANES)),                        # w2r
                w_spec((N_ATTRIBUTE, OUT_LANES)),                      # w2a
                w_spec((1, OUT_LANES)),                                # b2
            ],
            out_specs=pl.BlockSpec((bb, OUT_LANES), lambda i: (i, 0)),
        ),
        compiler_params=pltpu.CompilerParams(
            dimension_semantics=("parallel",)),     # batch axis shards across v7x TensorCores
    )(cls, fused["w_pr"], fused["w_pc"], fused["b1"], fused["w2r"], fused["w2a"], fused["b2"])

    # Lazy (B,1) views of the lane-dense slab; they fuse under the caller's jit.
    return {
        "ranking_logits": slab[:, COL_RANK:COL_RANK + 1],
        "attribute_logits": slab[:, COL_ATTR:COL_ATTR + 1],
        "adv_attribute_logits": slab[:, COL_ADV:COL_ADV + 1],
    }


def _linear_params(key, fan_in, fan_out):
    """PyTorch nn.Linear-style init (uniform +-1/sqrt(fan_in)); weight stored as (in, out)."""
    kw, kb = jax.random.split(key)
    bound = 1.0 / (fan_in ** 0.5)
    w = jax.random.uniform(kw, (fan_in, fan_out), jnp.float32, -bound, bound)
    b = jax.random.uniform(kb, (1, fan_out), jnp.float32, -bound, bound)
    return w, b


def init_params(key):
    keys = jax.random.split(key, 6)
    w_prer, b_prer = _linear_params(keys[0], N_RANKING, N_RANKING)       # preranker
    w_rank, b_rank = _linear_params(keys[1], N_RANKING, 1)               # ranking_layer
    w_prec, b_prec = _linear_params(keys[2], N_ATTRIBUTE, N_ATTRIBUTE)   # preclassifier
    w_gcls, b_gcls = _linear_params(keys[3], N_ATTRIBUTE, 1)             # gender_classifier
    w_prea, b_prea = _linear_params(keys[4], N_RANKING, N_RANKING)       # pre_adv_attribute
    w_adv, b_adv = _linear_params(keys[5], N_RANKING, 1)                 # adv_attribute
    return {
        "w_preranker": w_prer, "b_preranker": b_prer,
        "w_ranking": w_rank, "b_ranking": b_rank,
        "w_preclassifier": w_prec, "b_preclassifier": b_prec,
        "w_gender": w_gcls, "b_gender": b_gcls,
        "w_pre_adv": w_prea, "b_pre_adv": b_prea,
        "w_adv": w_adv, "b_adv": b_adv,
    }


def _reference(last_hidden_state, p):
    """Pure-JAX f32 reference with the exact PyTorch forward semantics (dropout = identity)."""
    cls = last_hidden_state[:, 0, :]
    xr = cls[:, :N_RANKING]
    xa = cls[:, N_RANKING:]
    h_r = jnp.maximum(xr @ p["w_preranker"] + p["b_preranker"], 0.0)
    rank = h_r @ p["w_ranking"] + p["b_ranking"]
    h_a = jnp.maximum(xa @ p["w_preclassifier"] + p["b_preclassifier"], 0.0)
    attr = h_a @ p["w_gender"] + p["b_gender"]
    h_v = jnp.maximum(xr @ p["w_pre_adv"] + p["b_pre_adv"], 0.0)
    adv = jax.nn.softmax(h_v @ p["w_adv"] + p["b_adv"], axis=-1)   # size-1 axis -> all ones
    return rank, attr, adv


if __name__ == "__main__":
    key = jax.random.PRNGKey(0)
    k_x, k_p = jax.random.split(key)

    B, S = 2, 8
    last_hidden = jax.random.normal(k_x, (B, S, REP_DIMENSION), dtype=jnp.float32)
    params = init_params(k_p)
    fused = fuse_params(params)

    fwd = jax.jit(disentangled_forward)            # jit so CLS slice + output views fuse
    out = fwd(last_hidden, fused)
    out = jax.tree_util.tree_map(jax.block_until_ready, out)

    ref_rank, ref_attr, ref_adv = _reference(last_hidden, params)
    # bf16 MXU operands with f32 accumulation vs. pure-f32 reference: loose-ish tolerance.
    assert jnp.allclose(out["ranking_logits"], ref_rank, atol=5e-2, rtol=5e-2)
    assert jnp.allclose(out["attribute_logits"], ref_attr, atol=5e-2, rtol=5e-2)
    assert jnp.allclose(out["adv_attribute_logits"], ref_adv, atol=1e-6, rtol=1e-6)

    print("KERNEL_OK")
</pallas_src>

<mosaic_0001>
module attributes {stable_mosaic.version = 11 : i64} {
  func.func @_heads_kernel(%arg0: i32, %arg1: memref<2x256xf32, #tpu.memory_space<vmem>>, %arg2: memref<128x128xbf16, #tpu.memory_space<vmem>>, %arg3: memref<128x128xbf16, #tpu.memory_space<vmem>>, %arg4: memref<1x256xf32, #tpu.memory_space<vmem>>, %arg5: memref<128x128xbf16, #tpu.memory_space<vmem>>, %arg6: memref<128x128xbf16, #tpu.memory_space<vmem>>, %arg7: memref<1x128xf32, #tpu.memory_space<vmem>>, %arg8: memref<2x128xf32, #tpu.memory_space<vmem>>) attributes {dimension_semantics = [#tpu.dimension_semantics<parallel>], iteration_bounds = array<i64: 1>, scalar_prefetch = 0 : i64, scratch_operands = 0 : i64, tpu.core_type = #tpu.core_type<tc>, window_params = [{transform_indices = @transform_0, window_bounds = array<i64: 2, 256>}, {pipeline_mode = #tpu.pipeline_mode<synchronous>, transform_indices = @transform_1, window_bounds = array<i64: 128, 128>}, {pipeline_mode = #tpu.pipeline_mode<synchronous>, transform_indices = @transform_2, window_bounds = array<i64: 128, 128>}, {pipeline_mode = #tpu.pipeline_mode<synchronous>, transform_indices = @transform_3, window_bounds = array<i64: 1, 256>}, {pipeline_mode = #tpu.pipeline_mode<synchronous>, transform_indices = @transform_4, window_bounds = array<i64: 128, 128>}, {pipeline_mode = #tpu.pipeline_mode<synchronous>, transform_indices = @transform_5, window_bounds = array<i64: 128, 128>}, {pipeline_mode = #tpu.pipeline_mode<synchronous>, transform_indices = @transform_6, window_bounds = array<i64: 1, 128>}, {transform_indices = @transform_7, window_bounds = array<i64: 2, 128>}]} {
    %c0 = arith.constant 0 : index
    %c0_0 = arith.constant 0 : index
    %0 = vector.load %arg1[%c0, %c0_0] : memref<2x256xf32, #tpu.memory_space<vmem>>, vector<2x256xf32>
    %1 = arith.truncf %0 : vector<2x256xf32> to vector<2x256xbf16>
    %2 = vector.extract_strided_slice %1 {offsets = [0, 0], sizes = [2, 128], strides = [1, 1]} : vector<2x256xbf16> to vector<2x128xbf16>
    %3 = vector.extract_strided_slice %1 {offsets = [0, 128], sizes = [2, 128], strides = [1, 1]} : vector<2x256xbf16> to vector<2x128xbf16>
    %c0_1 = arith.constant 0 : index
    %c0_2 = arith.constant 0 : index
    %4 = vector.load %arg2[%c0_1, %c0_2] : memref<128x128xbf16, #tpu.memory_space<vmem>>, vector<128x128xbf16>
    %cst = arith.constant dense<0.000000e+00> : vector<2x128xf32>
    %5 = tpu.matmul %2, %4, %cst {dimension_numbers = #tpu.dot_dimension_numbers<[1], [0], [0], [1], [0, 0, 1, 1], [], []>} : vector<2x128xbf16>, vector<128x128xbf16>, vector<2x128xf32> -> vector<2x128xf32>
    %c0_3 = arith.constant 0 : index
    %c0_4 = arith.constant 0 : index
    %6 = vector.load %arg4[%c0_3, %c0_4] : memref<1x256xf32, #tpu.memory_space<vmem>>, vector<1x128xf32>
    %7 = vector.broadcast %6 : vector<1x128xf32> to vector<2x128xf32>
    %8 = arith.addf %5, %7 : vector<2x128xf32>
    %c0_5 = arith.constant 0 : index
    %c0_6 = arith.constant 0 : index
    %9 = vector.load %arg3[%c0_5, %c0_6] : memref<128x128xbf16, #tpu.memory_space<vmem>>, vector<128x128xbf16>
    %cst_7 = arith.constant dense<0.000000e+00> : vector<2x128xf32>
    %10 = tpu.matmul %3, %9, %cst_7 {dimension_numbers = #tpu.dot_dimension_numbers<[1], [0], [0], [1], [0, 0, 1, 1], [], []>} : vector<2x128xbf16>, vector<128x128xbf16>, vector<2x128xf32> -> vector<2x128xf32>
    %c0_8 = arith.constant 0 : index
    %c128 = arith.constant 128 : index
    %11 = vector.load %arg4[%c0_8, %c128] : memref<1x256xf32, #tpu.memory_space<vmem>>, vector<1x128xf32>
    %12 = vector.broadcast %11 : vector<1x128xf32> to vector<2x128xf32>
    %13 = arith.addf %10, %12 : vector<2x128xf32>
    %cst_9 = arith.constant 0.000000e+00 : f32
    %14 = vector.broadcast %cst_9 : f32 to vector<2x128xf32>
    %15 = arith.maximumf %8, %14 : vector<2x128xf32>
    %16 = arith.truncf %15 : vector<2x128xf32> to vector<2x128xbf16>
    %cst_10 = arith.constant 0.000000e+00 : f32
    %17 = vector.broadcast %cst_10 : f32 to vector<2x128xf32>
    %18 = arith.maximumf %13, %17 : vector<2x128xf32>
    %19 = arith.truncf %18 : vector<2x128xf32> to vector<2x128xbf16>
    %c0_11 = arith.constant 0 : index
    %c0_12 = arith.constant 0 : index
    %20 = vector.load %arg5[%c0_11, %c0_12] : memref<128x128xbf16, #tpu.memory_space<vmem>>, vector<128x128xbf16>
    %cst_13 = arith.constant dense<0.000000e+00> : vector<2x128xf32>
    %21 = tpu.matmul %16, %20, %cst_13 {dimension_numbers = #tpu.dot_dimension_numbers<[1], [0], [0], [1], [0, 0, 1, 1], [], []>} : vector<2x128xbf16>, vector<128x128xbf16>, vector<2x128xf32> -> vector<2x128xf32>
    %c0_14 = arith.constant 0 : index
    %c0_15 = arith.constant 0 : index
    %22 = vector.load %arg6[%c0_14, %c0_15] : memref<128x128xbf16, #tpu.memory_space<vmem>>, vector<128x128xbf16>
    %cst_16 = arith.constant dense<0.000000e+00> : vector<2x128xf32>
    %23 = tpu.matmul %19, %22, %cst_16 {dimension_numbers = #tpu.dot_dimension_numbers<[1], [0], [0], [1], [0, 0, 1, 1], [], []>} : vector<2x128xbf16>, vector<128x128xbf16>, vector<2x128xf32> -> vector<2x128xf32>
    %24 = arith.addf %21, %23 : vector<2x128xf32>
    %c0_17 = arith.constant 0 : index
    %c0_18 = arith.constant 0 : index
    %25 = vector.load %arg7[%c0_17, %c0_18] : memref<1x128xf32, #tpu.memory_space<vmem>>, vector<1x128xf32>
    %26 = vector.broadcast %25 : vector<1x128xf32> to vector<2x128xf32>
    %27 = arith.addf %24, %26 : vector<2x128xf32>
    %c0_19 = arith.constant 0 : index
    %c0_20 = arith.constant 0 : index
    %28 = vector.load %arg8[%c0_19, %c0_20] : memref<2x128xf32, #tpu.memory_space<vmem>>, vector<2x128xf32>
    tpu.vector_store %arg8[%c0_19, %c0_20], %27 {strides = array<i32>} : memref<2x128xf32, #tpu.memory_space<vmem>>, vector<2x128xf32>,
    return
  }
  func.func @transform_0(%arg0: i32) -> (i32, i32) {
    %c0_i32 = arith.constant 0 : i32
    %c0_i32_0 = arith.constant 0 : i32
    return %arg0, %c0_i32 : i32, i32
  }
  func.func @transform_1(%arg0: i32) -> (i32, i32) {
    %c0_i32 = arith.constant 0 : i32
    %c0_i32_0 = arith.constant 0 : i32
    %c0_i32_1 = arith.constant 0 : i32
    return %c0_i32, %c0_i32_0 : i32, i32
  }
  func.func @transform_2(%arg0: i32) -> (i32, i32) {
    %c0_i32 = arith.constant 0 : i32
    %c0_i32_0 = arith.constant 0 : i32
    %c0_i32_1 = arith.constant 0 : i32
    return %c0_i32, %c0_i32_0 : i32, i32
  }
  func.func @transform_3(%arg0: i32) -> (i32, i32) {
    %c0_i32 = arith.constant 0 : i32
    %c0_i32_0 = arith.constant 0 : i32
    %c0_i32_1 = arith.constant 0 : i32
    return %c0_i32, %c0_i32_0 : i32, i32
  }
  func.func @transform_4(%arg0: i32) -> (i32, i32) {
    %c0_i32 = arith.constant 0 : i32
    %c0_i32_0 = arith.constant 0 : i32
    %c0_i32_1 = arith.constant 0 : i32
    return %c0_i32, %c0_i32_0 : i32, i32
  }
  func.func @transform_5(%arg0: i32) -> (i32, i32) {
    %c0_i32 = arith.constant 0 : i32
    %c0_i32_0 = arith.constant 0 : i32
    %c0_i32_1 = arith.constant 0 : i32
    return %c0_i32, %c0_i32_0 : i32, i32
  }
  func.func @transform_6(%arg0: i32) -> (i32, i32) {
    %c0_i32 = arith.constant 0 : i32
    %c0_i32_0 = arith.constant 0 : i32
    %c0_i32_1 = arith.constant 0 : i32
    return %c0_i32, %c0_i32_0 : i32, i32
  }
  func.func @transform_7(%arg0: i32) -> (i32, i32) {
    %c0_i32 = arith.constant 0 : i32
    %c0_i32_0 = arith.constant 0 : i32
    return %arg0, %c0_i32 : i32, i32
  }
}

</mosaic_0001>

<llo_original>
// kernel: disentangled_forward.1
$region0: #{disentangled_forward.1}
  #allocation0 [shape = 'u32[]', space=smem, size = 0x4, offset = 0x4, fixed_abs, tag = 'smem constant byte address 0x4 - core index']
  #allocation1 [shape = 'u32[144,128]{1,0:T(1,128)}', space=vmem, size = 0x12000, scoped, tag = 'internal scratch']
  %s0 = inlined_call_operand.vmem [shape: f32[2,256], index: 0, kind: input, shape index: {}]
  %s1 = inlined_call_operand.hbm [shape: bf16[128,128], index: 1, kind: input, shape index: {}]
  %s2 = inlined_call_operand.hbm [shape: bf16[128,128], index: 2, kind: input, shape index: {}]
  %s3 = inlined_call_operand.vmem [shape: f32[1,256], index: 3, kind: input, shape index: {}]
  %s4 = inlined_call_operand.hbm [shape: bf16[128,128], index: 4, kind: input, shape index: {}]
  %s5 = inlined_call_operand.hbm [shape: bf16[128,128], index: 5, kind: input, shape index: {}]
  %s6 = inlined_call_operand.vmem [shape: f32[1,128], index: 6, kind: input, shape index: {}]
  %s7 = inlined_call_operand.vmem [shape: f32[2,128], index: 7, kind: output, shape index: {}]
  %s8 = sld [smem:[#allocation0]]
  $region54: #{disentangled_forward.1} parent=0
    _
  %s10 = ssub.s32 1, %s8
  %s11 = scalar_select 0, %s10, %s8
  $region1: #{disentangled_forward.1} parent=0
    #allocation2 [shape = 'u8[32768]{0}', space=vmem, size = 0x8000, scoped, tag = 'input window, operand 1, single buffered']
    #allocation3 [shape = 's32[1]{0}', space=sflag, size = 0x4, scoped, tag = 'scoped memory for disentangled_forward.1']
    #allocation4 [shape = 'u8[32768]{0}', space=vmem, size = 0x8000, scoped, tag = 'input window, operand 2, single buffered']
    #allocation5 [shape = 's32[1]{0}', space=sflag, size = 0x4, scoped, tag = 'scoped memory for disentangled_forward.1']
    #allocation6 [shape = 'u8[32768]{0}', space=vmem, size = 0x8000, scoped, tag = 'input window, operand 4, single buffered']
    #allocation7 [shape = 'u8[32768]{0}', space=vmem, size = 0x8000, scoped, tag = 'input window, operand 5, single buffered']
    #allocation8 [shape = 's32[1]{0}', space=sflag, size = 0x4, scoped, tag = 'scoped memory for disentangled_forward.1']
    %12 = vsyncpa [#allocation3], 0
    %13 = vsyncpa [#allocation5], 0
    %14 = vsyncpa [#allocation8], 0
    // Predicated region
    $region2: #{disentangled_forward.1} parent=1 // pred_check
      _
    $region3: #{disentangled_forward.1} parent=1 // pred_check_branch
      %16 = sbr.rel (0) target = $region5
    $region4: #{disentangled_forward.1} parent=1 // pred_region
      _
    $region5: #{disentangled_forward.1} parent=1 // pred_fallthru
      _
    // Predicated region
    $region6: #{disentangled_forward.1} parent=1 // pred_check
      _
    $region7: #{disentangled_forward.1} parent=1 // pred_check_branch
      %18 = sbr.rel (0) target = $region9
    $region8: #{disentangled_forward.1} parent=1 // pred_region
      %s20 = ssub.s32 1024, 1024
      %21 = vsyncadd [#allocation3], %s20
      %s22 = sshll.u32 [#allocation2], 4
      %s23 = int_to_ptr.vmem [resolvable:$true] %s22
      %28 = dma.hbm_to_vmem [thread:$0]  %s1, 1024, %s23, [#allocation3], 64, 64, 4
    $region9: #{disentangled_forward.1} parent=1 // pred_fallthru
      _
    // Predicated region
    $region10: #{disentangled_forward.1} parent=1 // pred_check
      _
    $region11: #{disentangled_forward.1} parent=1 // pred_check_branch
      %30 = sbr.rel (0) target = $region13
    $region12: #{disentangled_forward.1} parent=1 // pred_region
      %s32 = ssub.s32 1024, 1024
      %33 = vsyncadd [#allocation5], %s32
      %s34 = sshll.u32 [#allocation4], 4
      %s35 = int_to_ptr.vmem [resolvable:$true] %s34
      %40 = dma.hbm_to_vmem [thread:$0]  %s2, 1024, %s35, [#allocation5], 64, 64, 4
    $region13: #{disentangled_forward.1} parent=1 // pred_fallthru
      _
    // Predicated region
    $region14: #{disentangled_forward.1} parent=1 // pred_check
      _
    $region15: #{disentangled_forward.1} parent=1 // pred_check_branch
      %42 = sbr.rel (0) target = $region17
    $region16: #{disentangled_forward.1} parent=1 // pred_region
      _
    $region17: #{disentangled_forward.1} parent=1 // pred_fallthru
      _
    // Predicated region
    $region18: #{disentangled_forward.1} parent=1 // pred_check
      _
    $region19: #{disentangled_forward.1} parent=1 // pred_check_branch
      %44 = sbr.rel (0) target = $region21
    $region20: #{disentangled_forward.1} parent=1 // pred_region
      %s46 = ssub.s32 1024, 1024
      %47 = vsyncadd [#allocation5], %s46
      %s48 = sshll.u32 [#allocation6], 4
      %s49 = int_to_ptr.vmem [resolvable:$true] %s48
      %54 = dma.hbm_to_vmem [thread:$0]  %s4, 1024, %s49, [#allocation5], 64, 64, 4
    $region21: #{disentangled_forward.1} parent=1 // pred_fallthru
      _
    // Predicated region
    $region22: #{disentangled_forward.1} parent=1 // pred_check
      _
    $region23: #{disentangled_forward.1} parent=1 // pred_check_branch
      %56 = sbr.rel (0) target = $region25
    $region24: #{disentangled_forward.1} parent=1 // pred_region
      %s58 = ssub.s32 1024, 1024
      %59 = vsyncadd [#allocation8], %s58
      %s60 = sshll.u32 [#allocation7], 4
      %s61 = int_to_ptr.vmem [resolvable:$true] %s60
      %66 = dma.hbm_to_vmem [thread:$0]  %s5, 1024, %s61, [#allocation8], 64, 64, 4
    $region25: #{disentangled_forward.1} parent=1 // pred_fallthru
      _
    // Predicated region
    $region26: #{disentangled_forward.1} parent=1 // pred_check
      _
    $region27: #{disentangled_forward.1} parent=1 // pred_check_branch
      %68 = sbr.rel (0) target = $region29
    $region28: #{disentangled_forward.1} parent=1 // pred_region
      _
    $region29: #{disentangled_forward.1} parent=1 // pred_fallthru
      _
    // Predicated region
    $region30: #{disentangled_forward.1} parent=1 // pred_check
      _
    $region31: #{disentangled_forward.1} parent=1 // pred_check_branch
      %70 = sbr.rel (0) target = $region33
    $region32: #{disentangled_forward.1} parent=1 // pred_region
      %71 = dma.done [#allocation3], 1024
    $region33: #{disentangled_forward.1} parent=1 // pred_fallthru
      _
    // Predicated region
    $region34: #{disentangled_forward.1} parent=1 // pred_check
      _
    $region35: #{disentangled_forward.1} parent=1 // pred_check_branch
      %73 = sbr.rel (0) target = $region37
    $region36: #{disentangled_forward.1} parent=1 // pred_region
      %74 = dma.done [#allocation5], 1024
    $region37: #{disentangled_forward.1} parent=1 // pred_fallthru
      _
    // Predicated region
    $region38: #{disentangled_forward.1} parent=1 // pred_check
      _
    $region39: #{disentangled_forward.1} parent=1 // pred_check_branch
      %76 = sbr.rel (0) target = $region41
    $region40: #{disentangled_forward.1} parent=1 // pred_region
      %77 = dma.done [#allocation5], 1024
    $region41: #{disentangled_forward.1} parent=1 // pred_fallthru
      _
    // Predicated region
    $region42: #{disentangled_forward.1} parent=1 // pred_check
      _
    $region43: #{disentangled_forward.1} parent=1 // pred_check_branch
      %79 = sbr.rel (0) target = $region45
    $region44: #{disentangled_forward.1} parent=1 // pred_region
      %80 = dma.done [#allocation8], 1024
    $region45: #{disentangled_forward.1} parent=1 // pred_fallthru
      _
    %v82 = vld [vmem:[%s0] sm:$0xf]
    %v85 = vunpack.c.l.s4 1983009808
    %v86 = vunpack.c.0.s8 %v85
    %v87 = vlaneseq
    %v88 = vshrl.u32 %v87, 7
    %v89 = vsub.s32 %v86, %v88
    %v90 = vrot.slane %v82, %v89
    %v91 = vcombine.high %v90, %v90
    %v94 = vpack.c.bf16 %v90, %v90
    %v95 = vpack.c.bf16 %v91, %v91
    %v96 = vld [vmem:[#allocation2] sm:$0xf]
    %v97 = vld [vmem:[#allocation2 + $0x4] sm:$0xf]
    %v98 = vld [vmem:[#allocation2 + $0x8] sm:$0xf]
    %v99 = vld [vmem:[#allocation2 + $0xc] sm:$0xf]
    %v100 = vld [vmem:[#allocation2 + $0x10] sm:$0xf]
    %v101 = vld [vmem:[#allocation2 + $0x14] sm:$0xf]
    %v102 = vld [vmem:[#allocation2 + $0x18] sm:$0xf]
    %v103 = vld [vmem:[#allocation2 + $0x1c] sm:$0xf]
    %v104 = vld [vmem:[#allocation2 + $0x20] sm:$0xf]
    %v105 = vld [vmem:[#allocation2 + $0x24] sm:$0xf]
    %v106 = vld [vmem:[#allocation2 + $0x28] sm:$0xf]
    %v107 = vld [vmem:[#allocation2 + $0x2c] sm:$0xf]
    %v108 = vld [vmem:[#allocation2 + $0x30] sm:$0xf]
    %v109 = vld [vmem:[#allocation2 + $0x34] sm:$0xf]
    %v110 = vld [vmem:[#allocation2 + $0x38] sm:$0xf]
    %v111 = vld [vmem:[#allocation2 + $0x3c] sm:$0xf]
    %v112 = vld [vmem:[%s3] sm:$0x1]
    %v114 = vlaneseq
    %v115 = vshrl.u32 %v114, 7
    %v116 = vsub.s32 0, %v115
    %v117 = vrot.slane %v112, %v116
    %v135 = vunpack.c.l.b16 %v96
    %v136 = vunpack.c.l.b16 %v97
    %v137 = vunpack.c.l.b16 %v98
    %v138 = vunpack.c.l.b16 %v99
    %v139 = vunpack.c.l.b16 %v100
    %v140 = vunpack.c.l.b16 %v101
    %v141 = vunpack.c.l.b16 %v102
    %v142 = vunpack.c.l.b16 %v103
    %v143 = vunpack.c.l.b16 %v104
    %v144 = vunpack.c.l.b16 %v105
    %v145 = vunpack.c.l.b16 %v106
    %v146 = vunpack.c.l.b16 %v107
    %v147 = vunpack.c.l.b16 %v108
    %v148 = vunpack.c.l.b16 %v109
    %v149 = vunpack.c.l.b16 %v110
    %v150 = vunpack.c.l.b16 %v111
    %v151 = vpack.c.b16 %v136, %v135
    %v152 = vpack.c.b16 %v138, %v137
    %v153 = vpack.c.b16 %v140, %v139
    %v154 = vpack.c.b16 %v142, %v141
    %v155 = vpack.c.b16 %v144, %v143
    %v156 = vpack.c.b16 %v146, %v145
    %v157 = vpack.c.b16 %v148, %v147
    %v158 = vpack.c.b16 %v150, %v149
    %167 = vmatprep.subr.bf16.mxu0 0
    %168 = vmatpush1.bf16.msra.mxu0 %v151
    %169 = vmatprep.subr.bf16.mxu0 0
    %170 = vmatpush1.bf16.msra.mxu0 %v152
    %171 = vmatprep.subr.bf16.mxu0 0
    %172 = vmatpush1.bf16.msra.mxu0 %v153
    %173 = vmatprep.subr.bf16.mxu0 0
    %174 = vmatpush1.bf16.msra.mxu0 %v154
    %175 = vmatprep.subr.bf16.mxu0 0
    %176 = vmatpush1.bf16.msra.mxu0 %v155
    %177 = vmatprep.subr.bf16.mxu0 0
    %178 = vmatpush1.bf16.msra.mxu0 %v156
    %179 = vmatprep.subr.bf16.mxu0 0
    %180 = vmatpush1.bf16.msra.mxu0 %v157
    %181 = vmatprep.subr.bf16.mxu0 0
    %182 = vmatpush1.bf16.msra.mxu0 %v158
    %183 = vmatprep.subr.bf16.mxu0 0
    %184 = vmatpush1.bf16.msra.mxu0 0
    %185 = vmatprep.subr.bf16.mxu0 0
    %186 = vmatpush1.bf16.msra.mxu0 0
    %187 = vmatprep.subr.bf16.mxu0 0
    %188 = vmatpush1.bf16.msra.mxu0 0
    %189 = vmatprep.subr.bf16.mxu0 0
    %190 = vmatpush1.bf16.msra.mxu0 0
    %191 = vmatprep.subr.bf16.mxu0 0
    %192 = vmatpush1.bf16.msra.mxu0 0
    %193 = vmatprep.subr.bf16.mxu0 0
    %194 = vmatpush1.bf16.msra.mxu0 0
    %195 = vmatprep.subr.bf16.mxu0 0
    %196 = vmatpush1.bf16.msra.mxu0 0
    %197 = vmatprep.subr.bf16.mxu0 0
    %198 = vmatpush1.bf16.msra.mxu0 0
    %199 = vmatprep.mubr.bf16.mxu0 0
    %200 = vmatmul.mubr.bf16.gmra.mrb[0].mxu0 %v94
    %v201 = vpop.f32.mrb[0].mxu0
    %v202 = vadd.f32 %v117, %v201
    %v203 = vpop.f32.mrb[0].mxu0
    %v204 = vpop.f32.mrb[0].mxu0
    %v205 = vpop.f32.mrb[0].mxu0
    %206 = vdwg.mxu0
    %v207 = vld [vmem:[#allocation4] sm:$0xf]
    %v208 = vld [vmem:[#allocation4 + $0x4] sm:$0xf]
    %v209 = vld [vmem:[#allocation4 + $0x8] sm:$0xf]
    %v210 = vld [vmem:[#allocation4 + $0xc] sm:$0xf]
    %v211 = vld [vmem:[#allocation4 + $0x10] sm:$0xf]
    %v212 = vld [vmem:[#allocation4 + $0x14] sm:$0xf]
    %v213 = vld [vmem:[#allocation4 + $0x18] sm:$0xf]
    %v214 = vld [vmem:[#allocation4 + $0x1c] sm:$0xf]
    %v215 = vld [vmem:[#allocation4 + $0x20] sm:$0xf]
    %v216 = vld [vmem:[#allocation4 + $0x24] sm:$0xf]
    %v217 = vld [vmem:[#allocation4 + $0x28] sm:$0xf]
    %v218 = vld [vmem:[#allocation4 + $0x2c] sm:$0xf]
    %v219 = vld [vmem:[#allocation4 + $0x30] sm:$0xf]
    %v220 = vld [vmem:[#allocation4 + $0x34] sm:$0xf]
    %v221 = vld [vmem:[#allocation4 + $0x38] sm:$0xf]
    %v222 = vld [vmem:[#allocation4 + $0x3c] sm:$0xf]
    %v223 = vld [vmem:[%s3 + $0x1] sm:$0x1]
    %v225 = vlaneseq
    %v226 = vshrl.u32 %v225, 7
    %v227 = vsub.s32 0, %v226
    %v228 = vrot.slane %v223, %v227
    %v246 = vunpack.c.l.b16 %v207
    %v247 = vunpack.c.l.b16 %v208
    %v248 = vunpack.c.l.b16 %v209
    %v249 = vunpack.c.l.b16 %v210
    %v250 = vunpack.c.l.b16 %v211
    %v251 = vunpack.c.l.b16 %v212
    %v252 = vunpack.c.l.b16 %v213
    %v253 = vunpack.c.l.b16 %v214
    %v254 = vunpack.c.l.b16 %v215
    %v255 = vunpack.c.l.b16 %v216
    %v256 = vunpack.c.l.b16 %v217
    %v257 = vunpack.c.l.b16 %v218
    %v258 = vunpack.c.l.b16 %v219
    %v259 = vunpack.c.l.b16 %v220
    %v260 = vunpack.c.l.b16 %v221
    %v261 = vunpack.c.l.b16 %v222
    %v262 = vpack.c.b16 %v247, %v246
    %v263 = vpack.c.b16 %v249, %v248
    %v264 = vpack.c.b16 %v251, %v250
    %v265 = vpack.c.b16 %v253, %v252
    %v266 = vpack.c.b16 %v255, %v254
    %v267 = vpack.c.b16 %v257, %v256
    %v268 = vpack.c.b16 %v259, %v258
    %v269 = vpack.c.b16 %v261, %v260
    %278 = vmatprep.subr.bf16.mxu0 0
    %279 = vmatpush1.bf16.msra.mxu0 %v262
    %280 = vmatprep.subr.bf16.mxu0 0
    %281 = vmatpush1.bf16.msra.mxu0 %v263
    %282 = vmatprep.subr.bf16.mxu0 0
    %283 = vmatpush1.bf16.msra.mxu0 %v264
    %284 = vmatprep.subr.bf16.mxu0 0
    %285 = vmatpush1.bf16.msra.mxu0 %v265
    %286 = vmatprep.subr.bf16.mxu0 0
    %287 = vmatpush1.bf16.msra.mxu0 %v266
    %288 = vmatprep.subr.bf16.mxu0 0
    %289 = vmatpush1.bf16.msra.mxu0 %v267
    %290 = vmatprep.subr.bf16.mxu0 0
    %291 = vmatpush1.bf16.msra.mxu0 %v268
    %292 = vmatprep.subr.bf16.mxu0 0
    %293 = vmatpush1.bf16.msra.mxu0 %v269
    %294 = vmatprep.subr.bf16.mxu0 0
    %295 = vmatpush1.bf16.msra.mxu0 0
    %296 = vmatprep.subr.bf16.mxu0 0
    %297 = vmatpush1.bf16.msra.mxu0 0
    %298 = vmatprep.subr.bf16.mxu0 0
    %299 = vmatpush1.bf16.msra.mxu0 0
    %300 = vmatprep.subr.bf16.mxu0 0
    %301 = vmatpush1.bf16.msra.mxu0 0
    %302 = vmatprep.subr.bf16.mxu0 0
    %303 = vmatpush1.bf16.msra.mxu0 0
    %304 = vmatprep.subr.bf16.mxu0 0
    %305 = vmatpush1.bf16.msra.mxu0 0
    %306 = vmatprep.subr.bf16.mxu0 0
    %307 = vmatpush1.bf16.msra.mxu0 0
    %308 = vmatprep.subr.bf16.mxu0 0
    %309 = vmatpush1.bf16.msra.mxu0 0
    %310 = vmatprep.mubr.bf16.mxu0 0
    %311 = vmatmul.mubr.bf16.gmra.mrb[0].mxu0 %v95
    %v312 = vpop.f32.mrb[0].mxu0
    %v313 = vadd.f32 %v228, %v312
    %v314 = vpop.f32.mrb[0].mxu0
    %v315 = vpop.f32.mrb[0].mxu0
    %v316 = vpop.f32.mrb[0].mxu0
    %317 = vdwg.mxu0
    %v318 = vmax.f32 %v202, 0.0
    %v319 = vpack.c.bf16 %v318, %v318
    %v320 = vmax.f32 %v313, 0.0
    %v321 = vpack.c.bf16 %v320, %v320
    %v322 = vld [vmem:[#allocation6] sm:$0xf]
    %v323 = vld [vmem:[#allocation6 + $0x4] sm:$0xf]
    %v324 = vld [vmem:[#allocation6 + $0x8] sm:$0xf]
    %v325 = vld [vmem:[#allocation6 + $0xc] sm:$0xf]
    %v326 = vld [vmem:[#allocation6 + $0x10] sm:$0xf]
    %v327 = vld [vmem:[#allocation6 + $0x14] sm:$0xf]
    %v328 = vld [vmem:[#allocation6 + $0x18] sm:$0xf]
    %v329 = vld [vmem:[#allocation6 + $0x1c] sm:$0xf]
    %v330 = vld [vmem:[#allocation6 + $0x20] sm:$0xf]
    %v331 = vld [vmem:[#allocation6 + $0x24] sm:$0xf]
    %v332 = vld [vmem:[#allocation6 + $0x28] sm:$0xf]
    %v333 = vld [vmem:[#allocation6 + $0x2c] sm:$0xf]
    %v334 = vld [vmem:[#allocation6 + $0x30] sm:$0xf]
    %v335 = vld [vmem:[#allocation6 + $0x34] sm:$0xf]
    %v336 = vld [vmem:[#allocation6 + $0x38] sm:$0xf]
    %v337 = vld [vmem:[#allocation6 + $0x3c] sm:$0xf]
    %v338 = vld [vmem:[#allocation7] sm:$0xf]
    %v339 = vld [vmem:[#allocation7 + $0x4] sm:$0xf]
    %v340 = vld [vmem:[#allocation7 + $0x8] sm:$0xf]
    %v341 = vld [vmem:[#allocation7 + $0xc] sm:$0xf]
    %v342 = vld [vmem:[#allocation7 + $0x10] sm:$0xf]
    %v343 = vld [vmem:[#allocation7 + $0x14] sm:$0xf]
    %v344 = vld [vmem:[#allocation7 + $0x18] sm:$0xf]
    %v345 = vld [vmem:[#allocation7 + $0x1c] sm:$0xf]
    %v346 = vld [vmem:[#allocation7 + $0x20] sm:$0xf]
    %v347 = vld [vmem:[#allocation7 + $0x24] sm:$0xf]
    %v348 = vld [vmem:[#allocation7 + $0x28] sm:$0xf]
    %v349 = vld [vmem:[#allocation7 + $0x2c] sm:$0xf]
    %v350 = vld [vmem:[#allocation7 + $0x30] sm:$0xf]
    %v351 = vld [vmem:[#allocation7 + $0x34] sm:$0xf]
    %v352 = vld [vmem:[#allocation7 + $0x38] sm:$0xf]
    %v353 = vld [vmem:[#allocation7 + $0x3c] sm:$0xf]
    %v370 = vunpack.c.l.b16 %v338
    %v371 = vunpack.c.l.b16 %v339
    %v372 = vunpack.c.l.b16 %v340
    %v373 = vunpack.c.l.b16 %v341
    %v374 = vunpack.c.l.b16 %v342
    %v375 = vunpack.c.l.b16 %v343
    %v376 = vunpack.c.l.b16 %v344
    %v377 = vunpack.c.l.b16 %v345
    %v378 = vunpack.c.l.b16 %v346
    %v379 = vunpack.c.l.b16 %v347
    %v380 = vunpack.c.l.b16 %v348
    %v381 = vunpack.c.l.b16 %v349
    %v382 = vunpack.c.l.b16 %v350
    %v383 = vunpack.c.l.b16 %v351
    %v384 = vunpack.c.l.b16 %v352
    %v385 = vunpack.c.l.b16 %v353
    %v386 = vpack.c.b16 %v371, %v370
    %v387 = vpack.c.b16 %v373, %v372
    %v388 = vpack.c.b16 %v375, %v374
    %v389 = vpack.c.b16 %v377, %v376
    %v390 = vpack.c.b16 %v379, %v378
    %v391 = vpack.c.b16 %v381, %v380
    %v392 = vpack.c.b16 %v383, %v382
    %v393 = vpack.c.b16 %v385, %v384
    %402 = vmatprep.subr.bf16.mxu0 0
    %403 = vmatpush1.bf16.msra.mxu0 %v386
    %404 = vmatprep.subr.bf16.mxu0 0
    %405 = vmatpush1.bf16.msra.mxu0 %v387
    %406 = vmatprep.subr.bf16.mxu0 0
    %407 = vmatpush1.bf16.msra.mxu0 %v388
    %408 = vmatprep.subr.bf16.mxu0 0
    %409 = vmatpush1.bf16.msra.mxu0 %v389
    %410 = vmatprep.subr.bf16.mxu0 0
    %411 = vmatpush1.bf16.msra.mxu0 %v390
    %412 = vmatprep.subr.bf16.mxu0 0
    %413 = vmatpush1.bf16.msra.mxu0 %v391
    %414 = vmatprep.subr.bf16.mxu0 0
    %415 = vmatpush1.bf16.msra.mxu0 %v392
    %416 = vmatprep.subr.bf16.mxu0 0
    %417 = vmatpush1.bf16.msra.mxu0 %v393
    %418 = vmatprep.subr.bf16.mxu0 0
    %419 = vmatpush1.bf16.msra.mxu0 0
    %420 = vmatprep.subr.bf16.mxu0 0
    %421 = vmatpush1.bf16.msra.mxu0 0
    %422 = vmatprep.subr.bf16.mxu0 0
    %423 = vmatpush1.bf16.msra.mxu0 0
    %424 = vmatprep.subr.bf16.mxu0 0
    %425 = vmatpush1.bf16.msra.mxu0 0
    %426 = vmatprep.subr.bf16.mxu0 0
    %427 = vmatpush1.bf16.msra.mxu0 0
    %428 = vmatprep.subr.bf16.mxu0 0
    %429 = vmatpush1.bf16.msra.mxu0 0
    %430 = vmatprep.subr.bf16.mxu0 0
    %431 = vmatpush1.bf16.msra.mxu0 0
    %432 = vmatprep.subr.bf16.mxu0 0
    %433 = vmatpush1.bf16.msra.mxu0 0
    %434 = vmatprep.mubr.bf16.mxu0 0
    %435 = vmatmul.mubr.bf16.gmra.mrb[0].mxu0 %v321
    %v436 = vpop.f32.mrb[0].mxu0
    %v437 = vadd.f32 0.0, %v436
    %v438 = vpop.f32.mrb[0].mxu0
    %v439 = vpop.f32.mrb[0].mxu0
    %v440 = vpop.f32.mrb[0].mxu0
    %441 = vdwg.mxu0
    %v458 = vunpack.c.l.b16 %v322
    %v459 = vunpack.c.l.b16 %v323
    %v460 = vunpack.c.l.b16 %v324
    %v461 = vunpack.c.l.b16 %v325
    %v462 = vunpack.c.l.b16 %v326
    %v463 = vunpack.c.l.b16 %v327
    %v464 = vunpack.c.l.b16 %v328
    %v465 = vunpack.c.l.b16 %v329
    %v466 = vunpack.c.l.b16 %v330
    %v467 = vunpack.c.l.b16 %v331
    %v468 = vunpack.c.l.b16 %v332
    %v469 = vunpack.c.l.b16 %v333
    %v470 = vunpack.c.l.b16 %v334
    %v471 = vunpack.c.l.b16 %v335
    %v472 = vunpack.c.l.b16 %v336
    %v473 = vunpack.c.l.b16 %v337
    %v474 = vpack.c.b16 %v459, %v458
    %v475 = vpack.c.b16 %v461, %v460
    %v476 = vpack.c.b16 %v463, %v462
    %v477 = vpack.c.b16 %v465, %v464
    %v478 = vpack.c.b16 %v467, %v466
    %v479 = vpack.c.b16 %v469, %v468
    %v480 = vpack.c.b16 %v471, %v470
    %v481 = vpack.c.b16 %v473, %v472
    %490 = vmatprep.subr.bf16.mxu0 0
    %491 = vmatpush1.bf16.msra.mxu0 %v474
    %492 = vmatprep.subr.bf16.mxu0 0
    %493 = vmatpush1.bf16.msra.mxu0 %v475
    %494 = vmatprep.subr.bf16.mxu0 0
    %495 = vmatpush1.bf16.msra.mxu0 %v476
    %496 = vmatprep.subr.bf16.mxu0 0
    %497 = vmatpush1.bf16.msra.mxu0 %v477
    %498 = vmatprep.subr.bf16.mxu0 0
    %499 = vmatpush1.bf16.msra.mxu0 %v478
    %500 = vmatprep.subr.bf16.mxu0 0
    %501 = vmatpush1.bf16.msra.mxu0 %v479
    %502 = vmatprep.subr.bf16.mxu0 0
    %503 = vmatpush1.bf16.msra.mxu0 %v480
    %504 = vmatprep.subr.bf16.mxu0 0
    %505 = vmatpush1.bf16.msra.mxu0 %v481
    %506 = vmatprep.subr.bf16.mxu0 0
    %507 = vmatpush1.bf16.msra.mxu0 0
    %508 = vmatprep.subr.bf16.mxu0 0
    %509 = vmatpush1.bf16.msra.mxu0 0
    %510 = vmatprep.subr.bf16.mxu0 0
    %511 = vmatpush1.bf16.msra.mxu0 0
    %512 = vmatprep.subr.bf16.mxu0 0
    %513 = vmatpush1.bf16.msra.mxu0 0
    %514 = vmatprep.subr.bf16.mxu0 0
    %515 = vmatpush1.bf16.msra.mxu0 0
    %516 = vmatprep.subr.bf16.mxu0 0
    %517 = vmatpush1.bf16.msra.mxu0 0
    %518 = vmatprep.subr.bf16.mxu0 0
    %519 = vmatpush1.bf16.msra.mxu0 0
    %520 = vmatprep.subr.bf16.mxu0 0
    %521 = vmatpush1.bf16.msra.mxu0 0
    %522 = vmatprep.mubr.bf16.mxu0 0
    %523 = vmatmul.mubr.bf16.gmra.mrb[0].mxu0 %v319
    %v524 = vpop.f32.mrb[0].mxu0
    %v525 = vadd.f32 %v437, %v524
    %v526 = vpop.f32.mrb[0].mxu0
    %v527 = vpop.f32.mrb[0].mxu0
    %v528 = vpop.f32.mrb[0].mxu0
    %529 = vdwg.mxu0
    %v530 = vld [vmem:[%s6] sm:$0x1]
    %v532 = vlaneseq
    %v533 = vshrl.u32 %v532, 7
    %v534 = vsub.s32 0, %v533
    %v535 = vrot.slane %v530, %v534
    %v537 = vadd.f32 %v525, %v535
    %538 = vst [vmem:[%s7] sm:$0x3] %v537
    // Predicated region
    $region46: #{disentangled_forward.1} parent=1 // pred_check
      _
    $region47: #{disentangled_forward.1} parent=1 // pred_check_branch
      %540 = sbr.rel (0) target = $region49
    $region48: #{disentangled_forward.1} parent=1 // pred_region
      _
    $region49: #{disentangled_forward.1} parent=1 // pred_fallthru
      _
    // Predicated region
    $region50: #{disentangled_forward.1} parent=1 // pred_check
      _
    $region51: #{disentangled_forward.1} parent=1 // pred_check_branch
      %542 = sbr.rel (0) target = $region53
    $region52: #{disentangled_forward.1} parent=1 // pred_region
      _
    $region53: #{disentangled_forward.1} parent=1 // pred_fallthru
      _
    %543 = vsyncpa [#allocation3], 1
    %544 = vsyncpa [#allocation5], 1
    %545 = vsyncpa [#allocation8], 1

</llo_original>
